<compile_context>
chip_gen: v7x
topology: tpu7x:2x2x1
jax: 0.10.0
libtpu: 0.0.40
codegen_flags: <defaults>
</compile_context>

<pallas_src>
import functools

import jax
import jax.numpy as jnp
from jax.experimental import pallas as pl
from jax.experimental.pallas import tpu as pltpu


# ----------------------------------------------------------------------------
# Kernel
# ----------------------------------------------------------------------------
def cvae_kernel(
    x_ref, cond_ref, eps_ref,
    we1_ref, be1_ref, we2_ref, be2_ref,
    whead_ref, bhead_ref,
    wd1z_ref, wd1c_ref, bd1_ref,
    wd2_ref, bd2_ref, wd3_ref, bd3_ref,
    out_ref,
    *, latent_dim,
):
    f32 = jnp.float32

    def mm(h, w_ref):
        # MXU matmul in the weights' stored dtype (bf16 fast path / f32 exact
        # path), f32 accumulation.  No per-step cast of the resident weights.
        w = w_ref[...]
        return jnp.dot(h.astype(w.dtype), w, preferred_element_type=f32)

    def linear(h, w_ref, b_ref):
        return mm(h, w_ref) + b_ref[...].astype(f32)

    def act(h):  # activation_function = nn.ReLU()
        return jnp.maximum(h, 0.0)

    x = x_ref[...].astype(f32)
    cond = cond_ref[...].astype(f32)
    eps = eps_ref[...].astype(f32)

    # ----- encoder -----
    h = act(linear(x, we1_ref, be1_ref))
    h = act(linear(h, we2_ref, be2_ref))

    # ----- fused mu / logvar head: one matmul, then lane-slice -----
    head = linear(h, whead_ref, bhead_ref)          # [tile_b, 2*latent]
    mu = head[:, :latent_dim]
    logvar = head[:, latent_dim:]

    # ----- reparameterize in f32: z = mu + eps * exp(0.5 * logvar) -----
    z = mu + eps * jnp.exp(0.5 * logvar)

    # ----- decoder (torch.cat(z, cond) handled as split matmul) -----
    d = act(mm(z, wd1z_ref) + mm(cond, wd1c_ref) + bd1_ref[...].astype(f32))
    d = act(linear(d, wd2_ref, bd2_ref))
    recon = linear(d, wd3_ref, bd3_ref)

    # Two sliced stores: [ recon | mu | logvar ] without a lane concat.
    input_dim = recon.shape[1]
    out_ref[:, :input_dim] = recon.astype(out_ref.dtype)
    out_ref[:, input_dim:] = head.astype(out_ref.dtype)


# ----------------------------------------------------------------------------
# Parameters (kernel-ready layout created once at init time)
# ----------------------------------------------------------------------------
def init_linear(key, in_dim, out_dim):
    """Torch-like Linear init; returns pre-transposed W[in, out], b[1, out]."""
    kw, kb = jax.random.split(key)
    bound = 1.0 / jnp.sqrt(float(in_dim))
    w = jax.random.uniform(kw, (out_dim, in_dim), jnp.float32, -bound, bound)
    b = jax.random.uniform(kb, (out_dim,), jnp.float32, -bound, bound)
    return jnp.transpose(w), b.reshape(1, -1)


def make_cvae_params(key, input_dim, latent_dim, condition_dim, hidden_layers):
    keys = jax.random.split(key, 8)
    p = {}
    # encoder: input_dim -> hidden[0] -> hidden[1]
    p["we1"], p["be1"] = init_linear(keys[0], input_dim, hidden_layers[0])
    p["we2"], p["be2"] = init_linear(keys[1], hidden_layers[0], hidden_layers[1])
    # heads (fused along the output axis: [mu | logvar])
    wmu, bmu = init_linear(keys[2], hidden_layers[1], latent_dim)
    wlv, blv = init_linear(keys[3], hidden_layers[1], latent_dim)
    p["whead"] = jnp.concatenate([wmu, wlv], axis=1)
    p["bhead"] = jnp.concatenate([bmu, blv], axis=1)
    # decoder: (latent+cond) -> hidden[1] -> hidden[0] -> input_dim
    wd1, p["bd1"] = init_linear(keys[4], latent_dim + condition_dim, hidden_layers[1])
    p["wd1z"] = wd1[:latent_dim, :]
    p["wd1c"] = wd1[latent_dim:, :]
    p["wd2"], p["bd2"] = init_linear(keys[5], hidden_layers[1], hidden_layers[0])
    p["wd3"], p["bd3"] = init_linear(keys[6], hidden_layers[0], input_dim)
    return p


_WEIGHT_KEYS = ("we1", "we2", "whead", "wd1z", "wd1c", "wd2", "wd3")


def cast_params_for_mxu(params, matmul_dtype=jnp.bfloat16):
    """One-time cast of weight matrices to the MXU dtype; biases stay f32."""
    out = dict(params)
    for k in _WEIGHT_KEYS:
        out[k] = params[k].astype(matmul_dtype)
    return out


# ----------------------------------------------------------------------------
# Wrapper
# ----------------------------------------------------------------------------
def _round_up(n, m):
    return ((n + m - 1) // m) * m


@functools.partial(jax.jit, static_argnames=("latent_dim", "tile_b"))
def cvae_forward(params, x, condition, eps, *, latent_dim, tile_b=512):
    B, input_dim = x.shape
    cond_dim = condition.shape[1]
    out_dim = input_dim + 2 * latent_dim
    h0 = params["we1"].shape[1]
    h1 = params["we2"].shape[1]

    w_dtype = params["we1"].dtype
    # bf16 packs two rows per sublane -> 16-row alignment; f32 -> 8.
    align = 16 if w_dtype == jnp.bfloat16 else 8

    if B <= tile_b:
        # Whole batch in one block (block == full array dims: always legal),
        # grid collapses to a single step.
        tile_b = B
    else:
        tile_b = _round_up(min(tile_b, B), align)
    grid = (pl.cdiv(B, tile_b),)
    # Any ragged last tile is handled by Pallas boundary masking; rows are
    # independent so no wrapper-side jnp.pad of x / condition / eps is needed.

    def batch_spec(feat):
        return pl.BlockSpec((tile_b, feat), lambda i: (i, 0))

    def resident_spec(arr):
        # Whole array as one block, constant index_map -> stays VMEM-resident
        # across grid steps.
        return pl.BlockSpec(arr.shape, lambda i: (0, 0))

    weight_args = (
        params["we1"], params["be1"], params["we2"], params["be2"],
        params["whead"], params["bhead"],
        params["wd1z"], params["wd1c"], params["bd1"],
        params["wd2"], params["bd2"], params["wd3"], params["bd3"],
    )

    in_specs = (
        [batch_spec(input_dim), batch_spec(cond_dim), batch_spec(latent_dim)]
        + [resident_spec(a) for a in weight_args]
    )

    # Advisory cost estimate so XLA can schedule neighboring HLOs around the
    # custom call: 7 matmuls (encoder x2, fused head, split decoder-in x2,
    # decoder x2), one exp per latent element.
    flops = 2 * B * (
        input_dim * h0 + h0 * h1 + h1 * (2 * latent_dim)
        + latent_dim * h1 + cond_dim * h1 + h1 * h0 + h0 * input_dim
    )
    transcendentals = B * latent_dim
    bytes_accessed = (
        sum(int(a.size) * a.dtype.itemsize for a in (x, condition, eps))
        + sum(int(a.size) * a.dtype.itemsize for a in weight_args)
        + B * out_dim * 4
    )

    kernel = functools.partial(cvae_kernel, latent_dim=latent_dim)

    out = pl.pallas_call(
        kernel,
        out_shape=jax.ShapeDtypeStruct((B, out_dim), jnp.float32),
        grid=grid,
        in_specs=in_specs,
        out_specs=pl.BlockSpec((tile_b, out_dim), lambda i: (i, 0)),
        compiler_params=pltpu.CompilerParams(
            dimension_semantics=("parallel",),
            vmem_limit_bytes=32 * 1024 * 1024,
        ),
        cost_estimate=pl.CostEstimate(
            flops=flops,
            transcendentals=transcendentals,
            bytes_accessed=bytes_accessed,
        ),
    )(x, condition, eps, *weight_args)

    recon = out[:, :input_dim]
    mu = out[:, input_dim:input_dim + latent_dim]
    logvar = out[:, input_dim + latent_dim:]
    return recon, mu, logvar


# ----------------------------------------------------------------------------
# Pure-JAX reference matching the PyTorch forward
# ----------------------------------------------------------------------------
def cvae_forward_ref(params, x, condition, eps, *, latent_dim):
    def lin(h, w, b):       # weights stored pre-transposed [in, out]
        return h @ w + b

    h = jax.nn.relu(lin(x, params["we1"], params["be1"]))
    h = jax.nn.relu(lin(h, params["we2"], params["be2"]))
    head = lin(h, params["whead"], params["bhead"])
    mu = head[:, :latent_dim]
    logvar = head[:, latent_dim:]
    z = mu + eps * jnp.exp(0.5 * logvar)
    combined = jnp.concatenate([z, condition], axis=1)
    wd1 = jnp.concatenate([params["wd1z"], params["wd1c"]], axis=0)
    d = jax.nn.relu(lin(combined, wd1, params["bd1"]))
    d = jax.nn.relu(lin(d, params["wd2"], params["bd2"]))
    recon = lin(d, params["wd3"], params["bd3"])
    return recon, mu, logvar


if __name__ == "__main__":
    # Small shapes consistent with the module.  batch=40 exercises both the
    # single-step (grid=(1,), block == full array) path and, with tile_b=8,
    # a multi-step grid with VMEM-resident weights.
    batch = 40
    input_dim = 16
    latent_dim = 8
    condition_dim = 4
    hidden_layers = (32, 16)

    key = jax.random.PRNGKey(0)
    k_params, k_x, k_c, k_eps = jax.random.split(key, 4)

    params = make_cvae_params(
        k_params, input_dim, latent_dim, condition_dim, hidden_layers
    )
    x = jax.random.normal(k_x, (batch, input_dim), jnp.float32)
    condition = jax.random.normal(k_c, (batch, condition_dim), jnp.float32)
    # torch.randn_like(std) -> the reparameterization noise is an explicit
    # input so the kernel is deterministic and testable.
    eps = jax.random.normal(k_eps, (batch, latent_dim), jnp.float32)

    recon_r, mu_r, logvar_r = cvae_forward_ref(
        params, x, condition, eps, latent_dim=latent_dim
    )

    # 1) Exact-semantics check, single grid step (default tile_b -> grid=(1,)).
    recon, mu, logvar = cvae_forward(params, x, condition, eps, latent_dim=latent_dim)
    jax.block_until_ready((recon, mu, logvar))
    assert recon.shape == (batch, input_dim)
    assert mu.shape == (batch, latent_dim)
    assert logvar.shape == (batch, latent_dim)
    assert jnp.allclose(recon, recon_r, atol=1e-5, rtol=1e-5)
    assert jnp.allclose(mu, mu_r, atol=1e-5, rtol=1e-5)
    assert jnp.allclose(logvar, logvar_r, atol=1e-5, rtol=1e-5)

    # 2) Exact-semantics check, multi-step grid (tile_b=8 -> grid=(5,)),
    #    exercising VMEM-resident weights across grid steps.
    recon2, mu2, logvar2 = cvae_forward(
        params, x, condition, eps, latent_dim=latent_dim, tile_b=8
    )
    jax.block_until_ready((recon2, mu2, logvar2))
    assert jnp.allclose(recon2, recon_r, atol=1e-5, rtol=1e-5)
    assert jnp.allclose(mu2, mu_r, atol=1e-5, rtol=1e-5)
    assert jnp.allclose(logvar2, logvar_r, atol=1e-5, rtol=1e-5)

    # 3) Performance path: weights pre-cast ONCE to bf16 (MXU fast path),
    #    f32 accumulation / elementwise, single grid step.
    params_bf16 = cast_params_for_mxu(params, jnp.bfloat16)
    recon_b, mu_b, logvar_b = cvae_forward(
        params_bf16, x, condition, eps, latent_dim=latent_dim
    )
    jax.block_until_ready((recon_b, mu_b, logvar_b))
    assert jnp.allclose(recon_b, recon_r, atol=1e-1, rtol=5e-2)
    assert jnp.allclose(mu_b, mu_r, atol=1e-1, rtol=5e-2)
    assert jnp.allclose(logvar_b, logvar_r, atol=1e-1, rtol=5e-2)

    print("KERNEL_OK")
</pallas_src>

<mosaic_0001>
module attributes {stable_mosaic.version = 11 : i64} {
  func.func @cvae_kernel(%arg0: i32, %arg1: memref<40x16xf32, #tpu.memory_space<vmem>>, %arg2: memref<40x4xf32, #tpu.memory_space<vmem>>, %arg3: memref<40x8xf32, #tpu.memory_space<vmem>>, %arg4: memref<16x32xf32, #tpu.memory_space<vmem>>, %arg5: memref<1x32xf32, #tpu.memory_space<vmem>>, %arg6: memref<32x16xf32, #tpu.memory_space<vmem>>, %arg7: memref<1x16xf32, #tpu.memory_space<vmem>>, %arg8: memref<16x16xf32, #tpu.memory_space<vmem>>, %arg9: memref<1x16xf32, #tpu.memory_space<vmem>>, %arg10: memref<8x16xf32, #tpu.memory_space<vmem>>, %arg11: memref<4x16xf32, #tpu.memory_space<vmem>>, %arg12: memref<1x16xf32, #tpu.memory_space<vmem>>, %arg13: memref<16x32xf32, #tpu.memory_space<vmem>>, %arg14: memref<1x32xf32, #tpu.memory_space<vmem>>, %arg15: memref<32x16xf32, #tpu.memory_space<vmem>>, %arg16: memref<1x16xf32, #tpu.memory_space<vmem>>, %arg17: memref<40x32xf32, #tpu.memory_space<vmem>>) attributes {dimension_semantics = [#tpu.dimension_semantics<parallel>], iteration_bounds = array<i64: 1>, scalar_prefetch = 0 : i64, scratch_operands = 0 : i64, tpu.core_type = #tpu.core_type<tc>, window_params = [{transform_indices = @transform_0, window_bounds = array<i64: 40, 16>}, {transform_indices = @transform_1, window_bounds = array<i64: 40, 4>}, {transform_indices = @transform_2, window_bounds = array<i64: 40, 8>}, {pipeline_mode = #tpu.pipeline_mode<synchronous>, transform_indices = @transform_3, window_bounds = array<i64: 16, 32>}, {pipeline_mode = #tpu.pipeline_mode<synchronous>, transform_indices = @transform_4, window_bounds = array<i64: 1, 32>}, {pipeline_mode = #tpu.pipeline_mode<synchronous>, transform_indices = @transform_5, window_bounds = array<i64: 32, 16>}, {pipeline_mode = #tpu.pipeline_mode<synchronous>, transform_indices = @transform_6, window_bounds = array<i64: 1, 16>}, {pipeline_mode = #tpu.pipeline_mode<synchronous>, transform_indices = @transform_7, window_bounds = array<i64: 16, 16>}, {pipeline_mode = #tpu.pipeline_mode<synchronous>, transform_indices = @transform_8, window_bounds = array<i64: 1, 16>}, {pipeline_mode = #tpu.pipeline_mode<synchronous>, transform_indices = @transform_9, window_bounds = array<i64: 8, 16>}, {pipeline_mode = #tpu.pipeline_mode<synchronous>, transform_indices = @transform_10, window_bounds = array<i64: 4, 16>}, {pipeline_mode = #tpu.pipeline_mode<synchronous>, transform_indices = @transform_11, window_bounds = array<i64: 1, 16>}, {pipeline_mode = #tpu.pipeline_mode<synchronous>, transform_indices = @transform_12, window_bounds = array<i64: 16, 32>}, {pipeline_mode = #tpu.pipeline_mode<synchronous>, transform_indices = @transform_13, window_bounds = array<i64: 1, 32>}, {pipeline_mode = #tpu.pipeline_mode<synchronous>, transform_indices = @transform_14, window_bounds = array<i64: 32, 16>}, {pipeline_mode = #tpu.pipeline_mode<synchronous>, transform_indices = @transform_15, window_bounds = array<i64: 1, 16>}, {transform_indices = @transform_16, window_bounds = array<i64: 40, 32>}]} {
    %c0 = arith.constant 0 : index
    %c0_0 = arith.constant 0 : index
    %0 = vector.load %arg1[%c0, %c0_0] : memref<40x16xf32, #tpu.memory_space<vmem>>, vector<40x16xf32>
    %c0_1 = arith.constant 0 : index
    %c0_2 = arith.constant 0 : index
    %1 = vector.load %arg2[%c0_1, %c0_2] : memref<40x4xf32, #tpu.memory_space<vmem>>, vector<40x4xf32>
    %c0_3 = arith.constant 0 : index
    %c0_4 = arith.constant 0 : index
    %2 = vector.load %arg3[%c0_3, %c0_4] : memref<40x8xf32, #tpu.memory_space<vmem>>, vector<40x8xf32>
    %c0_5 = arith.constant 0 : index
    %c0_6 = arith.constant 0 : index
    %3 = vector.load %arg4[%c0_5, %c0_6] : memref<16x32xf32, #tpu.memory_space<vmem>>, vector<16x32xf32>
    %cst = arith.constant dense<0.000000e+00> : vector<40x32xf32>
    %4 = tpu.matmul %0, %3, %cst {dimension_numbers = #tpu.dot_dimension_numbers<[1], [0], [0], [1], [0, 0, 1, 1], [], []>} : vector<40x16xf32>, vector<16x32xf32>, vector<40x32xf32> -> vector<40x32xf32>
    %c0_7 = arith.constant 0 : index
    %c0_8 = arith.constant 0 : index
    %5 = vector.load %arg5[%c0_7, %c0_8] : memref<1x32xf32, #tpu.memory_space<vmem>>, vector<1x32xf32>
    %6 = vector.broadcast %5 : vector<1x32xf32> to vector<40x32xf32>
    %7 = arith.addf %4, %6 : vector<40x32xf32>
    %cst_9 = arith.constant 0.000000e+00 : f32
    %8 = vector.broadcast %cst_9 : f32 to vector<40x32xf32>
    %9 = arith.maximumf %7, %8 : vector<40x32xf32>
    %c0_10 = arith.constant 0 : index
    %c0_11 = arith.constant 0 : index
    %10 = vector.load %arg6[%c0_10, %c0_11] : memref<32x16xf32, #tpu.memory_space<vmem>>, vector<32x16xf32>
    %cst_12 = arith.constant dense<0.000000e+00> : vector<40x16xf32>
    %11 = tpu.matmul %9, %10, %cst_12 {dimension_numbers = #tpu.dot_dimension_numbers<[1], [0], [0], [1], [0, 0, 1, 1], [], []>} : vector<40x32xf32>, vector<32x16xf32>, vector<40x16xf32> -> vector<40x16xf32>
    %c0_13 = arith.constant 0 : index
    %c0_14 = arith.constant 0 : index
    %12 = vector.load %arg7[%c0_13, %c0_14] : memref<1x16xf32, #tpu.memory_space<vmem>>, vector<1x16xf32>
    %13 = vector.broadcast %12 : vector<1x16xf32> to vector<40x16xf32>
    %14 = arith.addf %11, %13 : vector<40x16xf32>
    %cst_15 = arith.constant 0.000000e+00 : f32
    %15 = vector.broadcast %cst_15 : f32 to vector<40x16xf32>
    %16 = arith.maximumf %14, %15 : vector<40x16xf32>
    %c0_16 = arith.constant 0 : index
    %c0_17 = arith.constant 0 : index
    %17 = vector.load %arg8[%c0_16, %c0_17] : memref<16x16xf32, #tpu.memory_space<vmem>>, vector<16x16xf32>
    %cst_18 = arith.constant dense<0.000000e+00> : vector<40x16xf32>
    %18 = tpu.matmul %16, %17, %cst_18 {dimension_numbers = #tpu.dot_dimension_numbers<[1], [0], [0], [1], [0, 0, 1, 1], [], []>} : vector<40x16xf32>, vector<16x16xf32>, vector<40x16xf32> -> vector<40x16xf32>
    %c0_19 = arith.constant 0 : index
    %c0_20 = arith.constant 0 : index
    %19 = vector.load %arg9[%c0_19, %c0_20] : memref<1x16xf32, #tpu.memory_space<vmem>>, vector<1x16xf32>
    %20 = vector.broadcast %19 : vector<1x16xf32> to vector<40x16xf32>
    %21 = arith.addf %18, %20 : vector<40x16xf32>
    %22 = vector.extract_strided_slice %21 {offsets = [0, 0], sizes = [40, 8], strides = [1, 1]} : vector<40x16xf32> to vector<40x8xf32>
    %23 = vector.extract_strided_slice %21 {offsets = [0, 8], sizes = [40, 8], strides = [1, 1]} : vector<40x16xf32> to vector<40x8xf32>
    %cst_21 = arith.constant 5.000000e-01 : f32
    %24 = vector.broadcast %cst_21 : f32 to vector<40x8xf32>
    %25 = arith.mulf %24, %23 : vector<40x8xf32>
    %26 = math.exp %25 : vector<40x8xf32>
    %27 = arith.mulf %2, %26 : vector<40x8xf32>
    %28 = arith.addf %22, %27 : vector<40x8xf32>
    %c0_22 = arith.constant 0 : index
    %c0_23 = arith.constant 0 : index
    %29 = vector.load %arg10[%c0_22, %c0_23] : memref<8x16xf32, #tpu.memory_space<vmem>>, vector<8x16xf32>
    %cst_24 = arith.constant dense<0.000000e+00> : vector<40x16xf32>
    %30 = tpu.matmul %28, %29, %cst_24 {dimension_numbers = #tpu.dot_dimension_numbers<[1], [0], [0], [1], [0, 0, 1, 1], [], []>} : vector<40x8xf32>, vector<8x16xf32>, vector<40x16xf32> -> vector<40x16xf32>
    %c0_25 = arith.constant 0 : index
    %c0_26 = arith.constant 0 : index
    %31 = vector.load %arg11[%c0_25, %c0_26] : memref<4x16xf32, #tpu.memory_space<vmem>>, vector<4x16xf32>
    %cst_27 = arith.constant dense<0.000000e+00> : vector<40x16xf32>
    %32 = tpu.matmul %1, %31, %cst_27 {dimension_numbers = #tpu.dot_dimension_numbers<[1], [0], [0], [1], [0, 0, 1, 1], [], []>} : vector<40x4xf32>, vector<4x16xf32>, vector<40x16xf32> -> vector<40x16xf32>
    %33 = arith.addf %30, %32 : vector<40x16xf32>
    %c0_28 = arith.constant 0 : index
    %c0_29 = arith.constant 0 : index
    %34 = vector.load %arg12[%c0_28, %c0_29] : memref<1x16xf32, #tpu.memory_space<vmem>>, vector<1x16xf32>
    %35 = vector.broadcast %34 : vector<1x16xf32> to vector<40x16xf32>
    %36 = arith.addf %33, %35 : vector<40x16xf32>
    %cst_30 = arith.constant 0.000000e+00 : f32
    %37 = vector.broadcast %cst_30 : f32 to vector<40x16xf32>
    %38 = arith.maximumf %36, %37 : vector<40x16xf32>
    %c0_31 = arith.constant 0 : index
    %c0_32 = arith.constant 0 : index
    %39 = vector.load %arg13[%c0_31, %c0_32] : memref<16x32xf32, #tpu.memory_space<vmem>>, vector<16x32xf32>
    %cst_33 = arith.constant dense<0.000000e+00> : vector<40x32xf32>
    %40 = tpu.matmul %38, %39, %cst_33 {dimension_numbers = #tpu.dot_dimension_numbers<[1], [0], [0], [1], [0, 0, 1, 1], [], []>} : vector<40x16xf32>, vector<16x32xf32>, vector<40x32xf32> -> vector<40x32xf32>
    %c0_34 = arith.constant 0 : index
    %c0_35 = arith.constant 0 : index
    %41 = vector.load %arg14[%c0_34, %c0_35] : memref<1x32xf32, #tpu.memory_space<vmem>>, vector<1x32xf32>
    %42 = vector.broadcast %41 : vector<1x32xf32> to vector<40x32xf32>
    %43 = arith.addf %40, %42 : vector<40x32xf32>
    %cst_36 = arith.constant 0.000000e+00 : f32
    %44 = vector.broadcast %cst_36 : f32 to vector<40x32xf32>
    %45 = arith.maximumf %43, %44 : vector<40x32xf32>
    %c0_37 = arith.constant 0 : index
    %c0_38 = arith.constant 0 : index
    %46 = vector.load %arg15[%c0_37, %c0_38] : memref<32x16xf32, #tpu.memory_space<vmem>>, vector<32x16xf32>
    %cst_39 = arith.constant dense<0.000000e+00> : vector<40x16xf32>
    %47 = tpu.matmul %45, %46, %cst_39 {dimension_numbers = #tpu.dot_dimension_numbers<[1], [0], [0], [1], [0, 0, 1, 1], [], []>} : vector<40x32xf32>, vector<32x16xf32>, vector<40x16xf32> -> vector<40x16xf32>
    %c0_40 = arith.constant 0 : index
    %c0_41 = arith.constant 0 : index
    %48 = vector.load %arg16[%c0_40, %c0_41] : memref<1x16xf32, #tpu.memory_space<vmem>>, vector<1x16xf32>
    %49 = vector.broadcast %48 : vector<1x16xf32> to vector<40x16xf32>
    %50 = arith.addf %47, %49 : vector<40x16xf32>
    %c0_42 = arith.constant 0 : index
    %c0_43 = arith.constant 0 : index
    %51 = vector.load %arg17[%c0_42, %c0_43] : memref<40x32xf32, #tpu.memory_space<vmem>>, vector<40x16xf32>
    tpu.vector_store %arg17[%c0_42, %c0_43], %50 {strides = array<i32>} : memref<40x32xf32, #tpu.memory_space<vmem>>, vector<40x16xf32>,
    %c0_44 = arith.constant 0 : index
    %c16 = arith.constant 16 : index
    %52 = vector.load %arg17[%c0_44, %c16] : memref<40x32xf32, #tpu.memory_space<vmem>>, vector<40x16xf32>
    tpu.vector_store %arg17[%c0_44, %c16], %21 {strides = array<i32>} : memref<40x32xf32, #tpu.memory_space<vmem>>, vector<40x16xf32>,
    return
  }
  func.func @transform_0(%arg0: i32) -> (i32, i32) {
    %c0_i32 = arith.constant 0 : i32
    %c0_i32_0 = arith.constant 0 : i32
    return %arg0, %c0_i32 : i32, i32
  }
  func.func @transform_1(%arg0: i32) -> (i32, i32) {
    %c0_i32 = arith.constant 0 : i32
    %c0_i32_0 = arith.constant 0 : i32
    return %arg0, %c0_i32 : i32, i32
  }
  func.func @transform_2(%arg0: i32) -> (i32, i32) {
    %c0_i32 = arith.constant 0 : i32
    %c0_i32_0 = arith.constant 0 : i32
    return %arg0, %c0_i32 : i32, i32
  }
  func.func @transform_3(%arg0: i32) -> (i32, i32) {
    %c0_i32 = arith.constant 0 : i32
    %c0_i32_0 = arith.constant 0 : i32
    %c0_i32_1 = arith.constant 0 : i32
    return %c0_i32, %c0_i32_0 : i32, i32
  }
  func.func @transform_4(%arg0: i32) -> (i32, i32) {
    %c0_i32 = arith.constant 0 : i32
    %c0_i32_0 = arith.constant 0 : i32
    %c0_i32_1 = arith.constant 0 : i32
    return %c0_i32, %c0_i32_0 : i32, i32
  }
  func.func @transform_5(%arg0: i32) -> (i32, i32) {
    %c0_i32 = arith.constant 0 : i32
    %c0_i32_0 = arith.constant 0 : i32
    %c0_i32_1 = arith.constant 0 : i32
    return %c0_i32, %c0_i32_0 : i32, i32
  }
  func.func @transform_6(%arg0: i32) -> (i32, i32) {
    %c0_i32 = arith.constant 0 : i32
    %c0_i32_0 = arith.constant 0 : i32
    %c0_i32_1 = arith.constant 0 : i32
    return %c0_i32, %c0_i32_0 : i32, i32
  }
  func.func @transform_7(%arg0: i32) -> (i32, i32) {
    %c0_i32 = arith.constant 0 : i32
    %c0_i32_0 = arith.constant 0 : i32
    %c0_i32_1 = arith.constant 0 : i32
    return %c0_i32, %c0_i32_0 : i32, i32
  }
  func.func @transform_8(%arg0: i32) -> (i32, i32) {
    %c0_i32 = arith.constant 0 : i32
    %c0_i32_0 = arith.constant 0 : i32
    %c0_i32_1 = arith.constant 0 : i32
    return %c0_i32, %c0_i32_0 : i32, i32
  }
  func.func @transform_9(%arg0: i32) -> (i32, i32) {
    %c0_i32 = arith.constant 0 : i32
    %c0_i32_0 = arith.constant 0 : i32
    %c0_i32_1 = arith.constant 0 : i32
    return %c0_i32, %c0_i32_0 : i32, i32
  }
  func.func @transform_10(%arg0: i32) -> (i32, i32) {
    %c0_i32 = arith.constant 0 : i32
    %c0_i32_0 = arith.constant 0 : i32
    %c0_i32_1 = arith.constant 0 : i32
    return %c0_i32, %c0_i32_0 : i32, i32
  }
  func.func @transform_11(%arg0: i32) -> (i32, i32) {
    %c0_i32 = arith.constant 0 : i32
    %c0_i32_0 = arith.constant 0 : i32
    %c0_i32_1 = arith.constant 0 : i32
    return %c0_i32, %c0_i32_0 : i32, i32
  }
  func.func @transform_12(%arg0: i32) -> (i32, i32) {
    %c0_i32 = arith.constant 0 : i32
    %c0_i32_0 = arith.constant 0 : i32
    %c0_i32_1 = arith.constant 0 : i32
    return %c0_i32, %c0_i32_0 : i32, i32
  }
  func.func @transform_13(%arg0: i32) -> (i32, i32) {
    %c0_i32 = arith.constant 0 : i32
    %c0_i32_0 = arith.constant 0 : i32
    %c0_i32_1 = arith.constant 0 : i32
    return %c0_i32, %c0_i32_0 : i32, i32
  }
  func.func @transform_14(%arg0: i32) -> (i32, i32) {
    %c0_i32 = arith.constant 0 : i32
    %c0_i32_0 = arith.constant 0 : i32
    %c0_i32_1 = arith.constant 0 : i32
    return %c0_i32, %c0_i32_0 : i32, i32
  }
  func.func @transform_15(%arg0: i32) -> (i32, i32) {
    %c0_i32 = arith.constant 0 : i32
    %c0_i32_0 = arith.constant 0 : i32
    %c0_i32_1 = arith.constant 0 : i32
    return %c0_i32, %c0_i32_0 : i32, i32
  }
  func.func @transform_16(%arg0: i32) -> (i32, i32) {
    %c0_i32 = arith.constant 0 : i32
    %c0_i32_0 = arith.constant 0 : i32
    return %arg0, %c0_i32 : i32, i32
  }
}

</mosaic_0001>

<llo_original>
// kernel: cvae_forward.1
$region0: #{cvae_forward.1}
  #allocation0 [shape = 'u32[]', space=smem, size = 0x4, offset = 0x4, fixed_abs, tag = 'smem constant byte address 0x4 - core index']
  #allocation1 [shape = 'u32[144,128]{1,0:T(1,128)}', space=vmem, size = 0x12000, scoped, tag = 'internal scratch']
  %s0 = inlined_call_operand.vmem [shape: f32[40,16], index: 0, kind: input, shape index: {}]
  %s1 = inlined_call_operand.vmem [shape: f32[40,4], index: 1, kind: input, shape index: {}]
  %s2 = inlined_call_operand.vmem [shape: f32[40,8], index: 2, kind: input, shape index: {}]
  %s3 = inlined_call_operand.vmem [shape: f32[16,32], index: 3, kind: input, shape index: {}]
  %s4 = inlined_call_operand.vmem [shape: f32[1,32], index: 4, kind: input, shape index: {}]
  %s5 = inlined_call_operand.vmem [shape: f32[32,16], index: 5, kind: input, shape index: {}]
  %s6 = inlined_call_operand.vmem [shape: f32[1,16], index: 6, kind: input, shape index: {}]
  %s7 = inlined_call_operand.vmem [shape: f32[16,16], index: 7, kind: input, shape index: {}]
  %s8 = inlined_call_operand.vmem [shape: f32[1,16], index: 8, kind: input, shape index: {}]
  %s9 = inlined_call_operand.vmem [shape: f32[8,16], index: 9, kind: input, shape index: {}]
  %s10 = inlined_call_operand.vmem [shape: f32[4,16], index: 10, kind: input, shape index: {}]
  %s11 = inlined_call_operand.vmem [shape: f32[1,16], index: 11, kind: input, shape index: {}]
  %s12 = inlined_call_operand.vmem [shape: f32[16,32], index: 12, kind: input, shape index: {}]
  %s13 = inlined_call_operand.vmem [shape: f32[1,32], index: 13, kind: input, shape index: {}]
  %s14 = inlined_call_operand.vmem [shape: f32[32,16], index: 14, kind: input, shape index: {}]
  %s15 = inlined_call_operand.vmem [shape: f32[1,16], index: 15, kind: input, shape index: {}]
  %s16 = inlined_call_operand.vmem [shape: f32[40,32], index: 16, kind: output, shape index: {}]
  %s17 = sld [smem:[#allocation0]]
  $region74: #{cvae_forward.1} parent=0
    _
  %s19 = ssub.s32 1, %s17
  %s20 = scalar_select 0, %s19, %s17
  // Predicated region
  $region2: #{cvae_forward.1} parent=0 // pred_check
    _
  $region3: #{cvae_forward.1} parent=0 // pred_check_branch
    %22 = sbr.rel (0) target = $region5
  $region4: #{cvae_forward.1} parent=0 // pred_region
    _
  $region5: #{cvae_forward.1} parent=0 // pred_fallthru
    _
  // Predicated region
  $region6: #{cvae_forward.1} parent=0 // pred_check
    _
  $region7: #{cvae_forward.1} parent=0 // pred_check_branch
    %24 = sbr.rel (0) target = $region9
  $region8: #{cvae_forward.1} parent=0 // pred_region
    _
  $region9: #{cvae_forward.1} parent=0 // pred_fallthru
    _
  // Predicated region
  $region10: #{cvae_forward.1} parent=0 // pred_check
    _
  $region11: #{cvae_forward.1} parent=0 // pred_check_branch
    %26 = sbr.rel (0) target = $region13
  $region12: #{cvae_forward.1} parent=0 // pred_region
    _
  $region13: #{cvae_forward.1} parent=0 // pred_fallthru
    _
  // Predicated region
  $region14: #{cvae_forward.1} parent=0 // pred_check
    _
  $region15: #{cvae_forward.1} parent=0 // pred_check_branch
    %28 = sbr.rel (0) target = $region17
  $region16: #{cvae_forward.1} parent=0 // pred_region
    _
  $region17: #{cvae_forward.1} parent=0 // pred_fallthru
    _
  // Predicated region
  $region18: #{cvae_forward.1} parent=0 // pred_check
    _
  $region19: #{cvae_forward.1} parent=0 // pred_check_branch
    %30 = sbr.rel (0) target = $region21
  $region20: #{cvae_forward.1} parent=0 // pred_region
    _
  $region21: #{cvae_forward.1} parent=0 // pred_fallthru
    _
  // Predicated region
  $region22: #{cvae_forward.1} parent=0 // pred_check
    _
  $region23: #{cvae_forward.1} parent=0 // pred_check_branch
    %32 = sbr.rel (0) target = $region25
  $region24: #{cvae_forward.1} parent=0 // pred_region
    _
  $region25: #{cvae_forward.1} parent=0 // pred_fallthru
    _
  // Predicated region
  $region26: #{cvae_forward.1} parent=0 // pred_check
    _
  $region27: #{cvae_forward.1} parent=0 // pred_check_branch
    %34 = sbr.rel (0) target = $region29
  $region28: #{cvae_forward.1} parent=0 // pred_region
    _
  $region29: #{cvae_forward.1} parent=0 // pred_fallthru
    _
  // Predicated region
  $region30: #{cvae_forward.1} parent=0 // pred_check
    _
  $region31: #{cvae_forward.1} parent=0 // pred_check_branch
    %36 = sbr.rel (0) target = $region33
  $region32: #{cvae_forward.1} parent=0 // pred_region
    _
  $region33: #{cvae_forward.1} parent=0 // pred_fallthru
    _
  // Predicated region
  $region34: #{cvae_forward.1} parent=0 // pred_check
    _
  $region35: #{cvae_forward.1} parent=0 // pred_check_branch
    %38 = sbr.rel (0) target = $region37
  $region36: #{cvae_forward.1} parent=0 // pred_region
    _
  $region37: #{cvae_forward.1} parent=0 // pred_fallthru
    _
  // Predicated region
  $region38: #{cvae_forward.1} parent=0 // pred_check
    _
  $region39: #{cvae_forward.1} parent=0 // pred_check_branch
    %40 = sbr.rel (0) target = $region41
  $region40: #{cvae_forward.1} parent=0 // pred_region
    _
  $region41: #{cvae_forward.1} parent=0 // pred_fallthru
    _
  // Predicated region
  $region42: #{cvae_forward.1} parent=0 // pred_check
    _
  $region43: #{cvae_forward.1} parent=0 // pred_check_branch
    %42 = sbr.rel (0) target = $region45
  $region44: #{cvae_forward.1} parent=0 // pred_region
    _
  $region45: #{cvae_forward.1} parent=0 // pred_fallthru
    _
  // Predicated region
  $region46: #{cvae_forward.1} parent=0 // pred_check
    _
  $region47: #{cvae_forward.1} parent=0 // pred_check_branch
    %44 = sbr.rel (0) target = $region49
  $region48: #{cvae_forward.1} parent=0 // pred_region
    _
  $region49: #{cvae_forward.1} parent=0 // pred_fallthru
    _
  // Predicated region
  $region50: #{cvae_forward.1} parent=0 // pred_check
    _
  $region51: #{cvae_forward.1} parent=0 // pred_check_branch
    %46 = sbr.rel (0) target = $region53
  $region52: #{cvae_forward.1} parent=0 // pred_region
    _
  $region53: #{cvae_forward.1} parent=0 // pred_fallthru
    _
  // Predicated region
  $region54: #{cvae_forward.1} parent=0 // pred_check
    _
  $region55: #{cvae_forward.1} parent=0 // pred_check_branch
    %48 = sbr.rel (0) target = $region57
  $region56: #{cvae_forward.1} parent=0 // pred_region
    _
  $region57: #{cvae_forward.1} parent=0 // pred_fallthru
    _
  // Predicated region
  $region58: #{cvae_forward.1} parent=0 // pred_check
    _
  $region59: #{cvae_forward.1} parent=0 // pred_check_branch
    %50 = sbr.rel (0) target = $region61
  $region60: #{cvae_forward.1} parent=0 // pred_region
    _
  $region61: #{cvae_forward.1} parent=0 // pred_fallthru
    _
  // Predicated region
  $region62: #{cvae_forward.1} parent=0 // pred_check
    _
  $region63: #{cvae_forward.1} parent=0 // pred_check_branch
    %52 = sbr.rel (0) target = $region65
  $region64: #{cvae_forward.1} parent=0 // pred_region
    _
  $region65: #{cvae_forward.1} parent=0 // pred_fallthru
    _
  %v53 = vld [vmem:[%s0] sm:$0xff]
  %v54 = vld [vmem:[%s0 + $0x8] sm:$0xff]
  %v55 = vld [vmem:[%s0 + $0x10] sm:$0xff]
  %v56 = vld [vmem:[%s0 + $0x18] sm:$0xff]
  %v57 = vld [vmem:[%s0 + $0x20] sm:$0xff]
  %v58 = vld [vmem:[%s1] sm:$0xff]
  %v59 = vld [vmem:[%s1 + $0x8] sm:$0xff]
  %v60 = vld [vmem:[%s1 + $0x10] sm:$0xff]
  %v61 = vld [vmem:[%s1 + $0x18] sm:$0xff]
  %v62 = vld [vmem:[%s1 + $0x20] sm:$0xff]
  %v63 = vld [vmem:[%s2] sm:$0xff]
  %v64 = vld [vmem:[%s2 + $0x8] sm:$0xff]
  %v65 = vld [vmem:[%s2 + $0x10] sm:$0xff]
  %v66 = vld [vmem:[%s2 + $0x18] sm:$0xff]
  %v67 = vld [vmem:[%s2 + $0x20] sm:$0xff]
  %v68 = vld [vmem:[%s3] sm:$0xff]
  %v69 = vld [vmem:[%s3 + $0x8] sm:$0xff]
  %v70 = vld [vmem:[%s4] sm:$0x1]
  %v72 = vlaneseq
  %v73 = vshrl.u32 %v72, 7
  %v74 = vsub.s32 0, %v73
  %v75 = vrot.slane %v70, %v74
  %vm77 = vcmask 130048
  %v79 = vsel %vm77, %v53, 0
  %v82 = vsel %vm77, %v54, 0
  %v85 = vsel %vm77, %v55, 0
  %v88 = vsel %vm77, %v56, 0
  %v91 = vsel %vm77, %v57, 0
  %93 = vmatprep.subr.mxu0 0.0
  %94 = vmatpush1.msra.mxu0 %v68
  %95 = vmatprep.subr.mxu0 0.0
  %96 = vmatpush1.msra.mxu0 %v69
  %97 = vmatprep.subr.mxu0 0.0
  %98 = vmatpush1.msra.mxu0 0.0
  %99 = vmatprep.subr.mxu0 0.0
  %100 = vmatpush1.msra.mxu0 0.0
  %101 = vmatprep.subr.mxu0 0.0
  %102 = vmatpush1.msra.mxu0 0.0
  %103 = vmatprep.subr.mxu0 0.0
  %104 = vmatpush1.msra.mxu0 0.0
  %105 = vmatprep.subr.mxu0 0.0
  %106 = vmatpush1.msra.mxu0 0.0
  %107 = vmatprep.subr.mxu0 0.0
  %108 = vmatpush1.msra.mxu0 0.0
  %109 = vmatprep.subr.mxu0 0.0
  %110 = vmatpush1.msra.mxu0 0.0
  %111 = vmatprep.subr.mxu0 0.0
  %112 = vmatpush1.msra.mxu0 0.0
  %113 = vmatprep.subr.mxu0 0.0
  %114 = vmatpush1.msra.mxu0 0.0
  %115 = vmatprep.subr.mxu0 0.0
  %116 = vmatpush1.msra.mxu0 0.0
  %117 = vmatprep.subr.mxu0 0.0
  %118 = vmatpush1.msra.mxu0 0.0
  %119 = vmatprep.subr.mxu0 0.0
  %120 = vmatpush1.msra.mxu0 0.0
  %121 = vmatprep.subr.mxu0 0.0
  %122 = vmatpush1.msra.mxu0 0.0
  %123 = vmatprep.subr.mxu0 0.0
  %124 = vmatpush1.msra.mxu0 0.0
  %125 = vmatprep.subr.mxu0 0.0
  %126 = vmatpush1.msra.mxu0 0.0
  %127 = vmatprep.subr.mxu0 0.0
  %128 = vmatpush1.msra.mxu0 0.0
  %129 = vmatprep.subr.mxu0 0.0
  %130 = vmatpush1.msra.mxu0 0.0
  %131 = vmatprep.subr.mxu0 0.0
  %132 = vmatpush1.msra.mxu0 0.0
  %133 = vmatprep.subr.mxu0 0.0
  %134 = vmatpush1.msra.mxu0 0.0
  %135 = vmatprep.subr.mxu0 0.0
  %136 = vmatpush1.msra.mxu0 0.0
  %137 = vmatprep.subr.mxu0 0.0
  %138 = vmatpush1.msra.mxu0 0.0
  %139 = vmatprep.subr.mxu0 0.0
  %140 = vmatpush1.msra.mxu0 0.0
  %141 = vmatprep.subr.mxu0 0.0
  %142 = vmatpush1.msra.mxu0 0.0
  %143 = vmatprep.subr.mxu0 0.0
  %144 = vmatpush1.msra.mxu0 0.0
  %145 = vmatprep.subr.mxu0 0.0
  %146 = vmatpush1.msra.mxu0 0.0
  %147 = vmatprep.subr.mxu0 0.0
  %148 = vmatpush1.msra.mxu0 0.0
  %149 = vmatprep.subr.mxu0 0.0
  %150 = vmatpush1.msra.mxu0 0.0
  %151 = vmatprep.subr.mxu0 0.0
  %152 = vmatpush1.msra.mxu0 0.0
  %153 = vmatprep.subr.mxu0 0.0
  %154 = vmatpush1.msra.mxu0 0.0
  %155 = vmatprep.subr.mxu0 0.0
  %156 = vmatpush1.msra.mxu0 0.0
  %157 = vmatprep.mubr.f32.mxu0 0.0
  %158 = vmatmul.mubr.f32.gmra.mrb[0].mxu0 %v79
  %v159 = vpop.f32.mrb[0].mxu0
  %v160 = vadd.f32 %v75, %v159
  %v161 = vpop.f32.mrb[0].mxu0
  %162 = vmatprep.mubr.f32.mxu0 0.0
  %163 = vmatmul.mubr.f32.gmra.mrb[0].mxu0 %v82
  %v164 = vpop.f32.mrb[0].mxu0
  %v165 = vadd.f32 %v75, %v164
  %v166 = vpop.f32.mrb[0].mxu0
  %167 = vmatprep.mubr.f32.mxu0 0.0
  %168 = vmatmul.mubr.f32.gmra.mrb[0].mxu0 %v85
  %v169 = vpop.f32.mrb[0].mxu0
  %v170 = vadd.f32 %v75, %v169
  %v171 = vpop.f32.mrb[0].mxu0
  %172 = vmatprep.mubr.f32.mxu0 0.0
  %173 = vmatmul.mubr.f32.gmra.mrb[0].mxu0 %v88
  %v174 = vpop.f32.mrb[0].mxu0
  %v175 = vadd.f32 %v75, %v174
  %v176 = vpop.f32.mrb[0].mxu0
  %177 = vmatprep.mubr.f32.mxu0 0.0
  %178 = vmatmul.mubr.f32.gmra.mrb[0].mxu0 %v91
  %v179 = vpop.f32.mrb[0].mxu0
  %v180 = vadd.f32 %v75, %v179
  %v181 = vpop.f32.mrb[0].mxu0
  %182 = vdwg.mxu0
  %v183 = vmax.f32 %v160, 0.0
  %v184 = vmax.f32 %v165, 0.0
  %v185 = vmax.f32 %v170, 0.0
  %v186 = vmax.f32 %v175, 0.0
  %v187 = vmax.f32 %v180, 0.0
  %v188 = vld [vmem:[%s5] sm:$0xff]
  %v189 = vld [vmem:[%s5 + $0x8] sm:$0xff]
  %v190 = vld [vmem:[%s5 + $0x10] sm:$0xff]
  %v191 = vld [vmem:[%s5 + $0x18] sm:$0xff]
  %v192 = vld [vmem:[%s6] sm:$0x1]
  %v194 = vlaneseq
  %v195 = vshrl.u32 %v194, 7
  %v196 = vsub.s32 0, %v195
  %v197 = vrot.slane %v192, %v196
  %vm199 = vcmask 261120
  %v201 = vsel %vm199, %v183, 0
  %v204 = vsel %vm199, %v184, 0
  %v207 = vsel %vm199, %v185, 0
  %v210 = vsel %vm199, %v186, 0
  %v213 = vsel %vm199, %v187, 0
  %215 = vmatprep.subr.mxu0 0.0
  %216 = vmatpush1.msra.mxu0 %v188
  %217 = vmatprep.subr.mxu0 0.0
  %218 = vmatpush1.msra.mxu0 %v189
  %219 = vmatprep.subr.mxu0 0.0
  %220 = vmatpush1.msra.mxu0 %v190
  %221 = vmatprep.subr.mxu0 0.0
  %222 = vmatpush1.msra.mxu0 %v191
  %223 = vmatprep.subr.mxu0 0.0
  %224 = vmatpush1.msra.mxu0 0.0
  %225 = vmatprep.subr.mxu0 0.0
  %226 = vmatpush1.msra.mxu0 0.0
  %227 = vmatprep.subr.mxu0 0.0
  %228 = vmatpush1.msra.mxu0 0.0
  %229 = vmatprep.subr.mxu0 0.0
  %230 = vmatpush1.msra.mxu0 0.0
  %231 = vmatprep.subr.mxu0 0.0
  %232 = vmatpush1.msra.mxu0 0.0
  %233 = vmatprep.subr.mxu0 0.0
  %234 = vmatpush1.msra.mxu0 0.0
  %235 = vmatprep.subr.mxu0 0.0
  %236 = vmatpush1.msra.mxu0 0.0
  %237 = vmatprep.subr.mxu0 0.0
  %238 = vmatpush1.msra.mxu0 0.0
  %239 = vmatprep.subr.mxu0 0.0
  %240 = vmatpush1.msra.mxu0 0.0
  %241 = vmatprep.subr.mxu0 0.0
  %242 = vmatpush1.msra.mxu0 0.0
  %243 = vmatprep.subr.mxu0 0.0
  %244 = vmatpush1.msra.mxu0 0.0
  %245 = vmatprep.subr.mxu0 0.0
  %246 = vmatpush1.msra.mxu0 0.0
  %247 = vmatprep.subr.mxu0 0.0
  %248 = vmatpush1.msra.mxu0 0.0
  %249 = vmatprep.subr.mxu0 0.0
  %250 = vmatpush1.msra.mxu0 0.0
  %251 = vmatprep.subr.mxu0 0.0
  %252 = vmatpush1.msra.mxu0 0.0
  %253 = vmatprep.subr.mxu0 0.0
  %254 = vmatpush1.msra.mxu0 0.0
  %255 = vmatprep.subr.mxu0 0.0
  %256 = vmatpush1.msra.mxu0 0.0
  %257 = vmatprep.subr.mxu0 0.0
  %258 = vmatpush1.msra.mxu0 0.0
  %259 = vmatprep.subr.mxu0 0.0
  %260 = vmatpush1.msra.mxu0 0.0
  %261 = vmatprep.subr.mxu0 0.0
  %262 = vmatpush1.msra.mxu0 0.0
  %263 = vmatprep.subr.mxu0 0.0
  %264 = vmatpush1.msra.mxu0 0.0
  %265 = vmatprep.subr.mxu0 0.0
  %266 = vmatpush1.msra.mxu0 0.0
  %267 = vmatprep.subr.mxu0 0.0
  %268 = vmatpush1.msra.mxu0 0.0
  %269 = vmatprep.subr.mxu0 0.0
  %270 = vmatpush1.msra.mxu0 0.0
  %271 = vmatprep.subr.mxu0 0.0
  %272 = vmatpush1.msra.mxu0 0.0
  %273 = vmatprep.subr.mxu0 0.0
  %274 = vmatpush1.msra.mxu0 0.0
  %275 = vmatprep.subr.mxu0 0.0
  %276 = vmatpush1.msra.mxu0 0.0
  %277 = vmatprep.subr.mxu0 0.0
  %278 = vmatpush1.msra.mxu0 0.0
  %279 = vmatprep.mubr.f32.mxu0 0.0
  %280 = vmatmul.mubr.f32.gmra.mrb[0].mxu0 %v201
  %v281 = vpop.f32.mrb[0].mxu0
  %v282 = vadd.f32 %v197, %v281
  %v283 = vpop.f32.mrb[0].mxu0
  %284 = vmatprep.mubr.f32.mxu0 0.0
  %285 = vmatmul.mubr.f32.gmra.mrb[0].mxu0 %v204
  %v286 = vpop.f32.mrb[0].mxu0
  %v287 = vadd.f32 %v197, %v286
  %v288 = vpop.f32.mrb[0].mxu0
  %289 = vmatprep.mubr.f32.mxu0 0.0
  %290 = vmatmul.mubr.f32.gmra.mrb[0].mxu0 %v207
  %v291 = vpop.f32.mrb[0].mxu0
  %v292 = vadd.f32 %v197, %v291
  %v293 = vpop.f32.mrb[0].mxu0
  %294 = vmatprep.mubr.f32.mxu0 0.0
  %295 = vmatmul.mubr.f32.gmra.mrb[0].mxu0 %v210
  %v296 = vpop.f32.mrb[0].mxu0
  %v297 = vadd.f32 %v197, %v296
  %v298 = vpop.f32.mrb[0].mxu0
  %299 = vmatprep.mubr.f32.mxu0 0.0
  %300 = vmatmul.mubr.f32.gmra.mrb[0].mxu0 %v213
  %v301 = vpop.f32.mrb[0].mxu0
  %v302 = vadd.f32 %v197, %v301
  %v303 = vpop.f32.mrb[0].mxu0
  %304 = vdwg.mxu0
  %v305 = vmax.f32 %v282, 0.0
  %v306 = vmax.f32 %v287, 0.0
  %v307 = vmax.f32 %v292, 0.0
  %v308 = vmax.f32 %v297, 0.0
  %v309 = vmax.f32 %v302, 0.0
  %v310 = vld [vmem:[%s7] sm:$0xff]
  %v311 = vld [vmem:[%s7 + $0x8] sm:$0xff]
  %v312 = vld [vmem:[%s8] sm:$0x1]
  %v314 = vlaneseq
  %v315 = vshrl.u32 %v314, 7
  %v316 = vsub.s32 0, %v315
  %v317 = vrot.slane %v312, %v316
  %v320 = vsel %vm77, %v305, 0
  %v323 = vsel %vm77, %v306, 0
  %v326 = vsel %vm77, %v307, 0
  %v329 = vsel %vm77, %v308, 0
  %v332 = vsel %vm77, %v309, 0
  %334 = vmatprep.subr.mxu0 0.0
  %335 = vmatpush1.msra.mxu0 %v310
  %336 = vmatprep.subr.mxu0 0.0
  %337 = vmatpush1.msra.mxu0 %v311
  %338 = vmatprep.subr.mxu0 0.0
  %339 = vmatpush1.msra.mxu0 0.0
  %340 = vmatprep.subr.mxu0 0.0
  %341 = vmatpush1.msra.mxu0 0.0
  %342 = vmatprep.subr.mxu0 0.0
  %343 = vmatpush1.msra.mxu0 0.0
  %344 = vmatprep.subr.mxu0 0.0
  %345 = vmatpush1.msra.mxu0 0.0
  %346 = vmatprep.subr.mxu0 0.0
  %347 = vmatpush1.msra.mxu0 0.0
  %348 = vmatprep.subr.mxu0 0.0
  %349 = vmatpush1.msra.mxu0 0.0
  %350 = vmatprep.subr.mxu0 0.0
  %351 = vmatpush1.msra.mxu0 0.0
  %352 = vmatprep.subr.mxu0 0.0
  %353 = vmatpush1.msra.mxu0 0.0
  %354 = vmatprep.subr.mxu0 0.0
  %355 = vmatpush1.msra.mxu0 0.0
  %356 = vmatprep.subr.mxu0 0.0
  %357 = vmatpush1.msra.mxu0 0.0
  %358 = vmatprep.subr.mxu0 0.0
  %359 = vmatpush1.msra.mxu0 0.0
  %360 = vmatprep.subr.mxu0 0.0
  %361 = vmatpush1.msra.mxu0 0.0
  %362 = vmatprep.subr.mxu0 0.0
  %363 = vmatpush1.msra.mxu0 0.0
  %364 = vmatprep.subr.mxu0 0.0
  %365 = vmatpush1.msra.mxu0 0.0
  %366 = vmatprep.subr.mxu0 0.0
  %367 = vmatpush1.msra.mxu0 0.0
  %368 = vmatprep.subr.mxu0 0.0
  %369 = vmatpush1.msra.mxu0 0.0
  %370 = vmatprep.subr.mxu0 0.0
  %371 = vmatpush1.msra.mxu0 0.0
  %372 = vmatprep.subr.mxu0 0.0
  %373 = vmatpush1.msra.mxu0 0.0
  %374 = vmatprep.subr.mxu0 0.0
  %375 = vmatpush1.msra.mxu0 0.0
  %376 = vmatprep.subr.mxu0 0.0
  %377 = vmatpush1.msra.mxu0 0.0
  %378 = vmatprep.subr.mxu0 0.0
  %379 = vmatpush1.msra.mxu0 0.0
  %380 = vmatprep.subr.mxu0 0.0
  %381 = vmatpush1.msra.mxu0 0.0
  %382 = vmatprep.subr.mxu0 0.0
  %383 = vmatpush1.msra.mxu0 0.0
  %384 = vmatprep.subr.mxu0 0.0
  %385 = vmatpush1.msra.mxu0 0.0
  %386 = vmatprep.subr.mxu0 0.0
  %387 = vmatpush1.msra.mxu0 0.0
  %388 = vmatprep.subr.mxu0 0.0
  %389 = vmatpush1.msra.mxu0 0.0
  %390 = vmatprep.subr.mxu0 0.0
  %391 = vmatpush1.msra.mxu0 0.0
  %392 = vmatprep.subr.mxu0 0.0
  %393 = vmatpush1.msra.mxu0 0.0
  %394 = vmatprep.subr.mxu0 0.0
  %395 = vmatpush1.msra.mxu0 0.0
  %396 = vmatprep.subr.mxu0 0.0
  %397 = vmatpush1.msra.mxu0 0.0
  %398 = vmatprep.mubr.f32.mxu0 0.0
  %399 = vmatmul.mubr.f32.gmra.mrb[0].mxu0 %v320
  %v400 = vpop.f32.mrb[0].mxu0
  %v401 = vadd.f32 %v317, %v400
  %v402 = vpop.f32.mrb[0].mxu0
  %403 = vmatprep.mubr.f32.mxu0 0.0
  %404 = vmatmul.mubr.f32.gmra.mrb[0].mxu0 %v323
  %v405 = vpop.f32.mrb[0].mxu0
  %v406 = vadd.f32 %v317, %v405
  %v407 = vpop.f32.mrb[0].mxu0
  %408 = vmatprep.mubr.f32.mxu0 0.0
  %409 = vmatmul.mubr.f32.gmra.mrb[0].mxu0 %v326
  %v410 = vpop.f32.mrb[0].mxu0
  %v411 = vadd.f32 %v317, %v410
  %v412 = vpop.f32.mrb[0].mxu0
  %413 = vmatprep.mubr.f32.mxu0 0.0
  %414 = vmatmul.mubr.f32.gmra.mrb[0].mxu0 %v329
  %v415 = vpop.f32.mrb[0].mxu0
  %v416 = vadd.f32 %v317, %v415
  %v417 = vpop.f32.mrb[0].mxu0
  %418 = vmatprep.mubr.f32.mxu0 0.0
  %419 = vmatmul.mubr.f32.gmra.mrb[0].mxu0 %v332
  %v420 = vpop.f32.mrb[0].mxu0
  %v421 = vadd.f32 %v317, %v420
  %v422 = vpop.f32.mrb[0].mxu0
  %423 = vdwg.mxu0
  %v424 = vmul.f32 %v401, 0.5
  %v425 = vmul.f32 %v406, 0.5
  %v426 = vmul.f32 %v411, 0.5
  %v427 = vmul.f32 %v416, 0.5
  %v428 = vmul.f32 %v421, 0.5
  %v429 = vmul.f32 %v424, 1.442695
  %v430 = vpow.pop %v429
  %v431 = vmul.f32 %v425, 1.442695
  %v432 = vpow.pop %v431
  %v433 = vmul.f32 %v426, 1.442695
  %v434 = vpow.pop %v433
  %v435 = vmul.f32 %v427, 1.442695
  %v436 = vpow.pop %v435
  %v437 = vmul.f32 %v428, 1.442695
  %v438 = vpow.pop %v437
  %444 = vrot.lane.b32.xlu0 %v430, 120
  %v445 = vpop.permute.xlu0 %444
  %446 = vrot.lane.b32.xlu0 %v432, 120
  %v447 = vpop.permute.xlu0 %446
  %448 = vrot.lane.b32.xlu0 %v434, 120
  %v449 = vpop.permute.xlu0 %448
  %450 = vrot.lane.b32.xlu0 %v436, 120
  %v451 = vpop.permute.xlu0 %450
  %452 = vrot.lane.b32.xlu0 %v438, 120
  %v453 = vpop.permute.xlu0 %452
  %v459 = vmul.f32 %v63, %v445
  %v460 = vmul.f32 %v64, %v447
  %v461 = vmul.f32 %v65, %v449
  %v462 = vmul.f32 %v66, %v451
  %v463 = vmul.f32 %v67, %v453
  %v464 = vadd.f32 %v401, %v459
  %v465 = vadd.f32 %v406, %v460
  %v466 = vadd.f32 %v411, %v461
  %v467 = vadd.f32 %v416, %v462
  %v468 = vadd.f32 %v421, %v463
  %v469 = vld [vmem:[%s9] sm:$0xff]
  %v470 = vld [vmem:[%s10] sm:$0xf]
  %vm471 = vcmask 31744
  %v473 = vsel %vm471, %v58, 0
  %v476 = vsel %vm471, %v59, 0
  %v479 = vsel %vm471, %v60, 0
  %v482 = vsel %vm471, %v61, 0
  %v485 = vsel %vm471, %v62, 0
  %vm487 = vcmask 1043456
  %v489 = vsel %vm487, %v470, 0
  %491 = vmatprep.subr.mxu0 0.0
  %492 = vmatpush1.msra.mxu0 %v489
  %493 = vmatprep.subr.mxu0 0.0
  %494 = vmatpush1.msra.mxu0 0.0
  %495 = vmatprep.subr.mxu0 0.0
  %496 = vmatpush1.msra.mxu0 0.0
  %497 = vmatprep.subr.mxu0 0.0
  %498 = vmatpush1.msra.mxu0 0.0
  %499 = vmatprep.subr.mxu0 0.0
  %500 = vmatpush1.msra.mxu0 0.0
  %501 = vmatprep.subr.mxu0 0.0
  %502 = vmatpush1.msra.mxu0 0.0
  %503 = vmatprep.subr.mxu0 0.0
  %504 = vmatpush1.msra.mxu0 0.0
  %505 = vmatprep.subr.mxu0 0.0
  %506 = vmatpush1.msra.mxu0 0.0
  %507 = vmatprep.subr.mxu0 0.0
  %508 = vmatpush1.msra.mxu0 0.0
  %509 = vmatprep.subr.mxu0 0.0
  %510 = vmatpush1.msra.mxu0 0.0
  %511 = vmatprep.subr.mxu0 0.0
  %512 = vmatpush1.msra.mxu0 0.0
  %513 = vmatprep.subr.mxu0 0.0
  %514 = vmatpush1.msra.mxu0 0.0
  %515 = vmatprep.subr.mxu0 0.0
  %516 = vmatpush1.msra.mxu0 0.0
  %517 = vmatprep.subr.mxu0 0.0
  %518 = vmatpush1.msra.mxu0 0.0
  %519 = vmatprep.subr.mxu0 0.0
  %520 = vmatpush1.msra.mxu0 0.0
  %521 = vmatprep.subr.mxu0 0.0
  %522 = vmatpush1.msra.mxu0 0.0
  %523 = vmatprep.subr.mxu0 0.0
  %524 = vmatpush1.msra.mxu0 0.0
  %525 = vmatprep.subr.mxu0 0.0
  %526 = vmatpush1.msra.mxu0 0.0
  %527 = vmatprep.subr.mxu0 0.0
  %528 = vmatpush1.msra.mxu0 0.0
  %529 = vmatprep.subr.mxu0 0.0
  %530 = vmatpush1.msra.mxu0 0.0
  %531 = vmatprep.subr.mxu0 0.0
  %532 = vmatpush1.msra.mxu0 0.0
  %533 = vmatprep.subr.mxu0 0.0
  %534 = vmatpush1.msra.mxu0 0.0
  %535 = vmatprep.subr.mxu0 0.0
  %536 = vmatpush1.msra.mxu0 0.0
  %537 = vmatprep.subr.mxu0 0.0
  %538 = vmatpush1.msra.mxu0 0.0
  %539 = vmatprep.subr.mxu0 0.0
  %540 = vmatpush1.msra.mxu0 0.0
  %541 = vmatprep.subr.mxu0 0.0
  %542 = vmatpush1.msra.mxu0 0.0
  %543 = vmatprep.subr.mxu0 0.0
  %544 = vmatpush1.msra.mxu0 0.0
  %545 = vmatprep.subr.mxu0 0.0
  %546 = vmatpush1.msra.mxu0 0.0
  %547 = vmatprep.subr.mxu0 0.0
  %548 = vmatpush1.msra.mxu0 0.0
  %549 = vmatprep.subr.mxu0 0.0
  %550 = vmatpush1.msra.mxu0 0.0
  %551 = vmatprep.subr.mxu0 0.0
  %552 = vmatpush1.msra.mxu0 0.0
  %553 = vmatprep.subr.mxu0 0.0
  %554 = vmatpush1.msra.mxu0 0.0
  %555 = vmatprep.mubr.f32.mxu0 0.0
  %556 = vmatmul.mubr.f32.gmra.mrb[0].mxu0 %v473
  %v557 = vpop.f32.mrb[0].mxu0
  %v558 = vadd.f32 0.0, %v557
  %v559 = vpop.f32.mrb[0].mxu0
  %560 = vmatprep.mubr.f32.mxu0 0.0
  %561 = vmatmul.mubr.f32.gmra.mrb[0].mxu0 %v476
  %v562 = vpop.f32.mrb[0].mxu0
  %v563 = vadd.f32 0.0, %v562
  %v564 = vpop.f32.mrb[0].mxu0
  %565 = vmatprep.mubr.f32.mxu0 0.0
  %566 = vmatmul.mubr.f32.gmra.mrb[0].mxu0 %v479
  %v567 = vpop.f32.mrb[0].mxu0
  %v568 = vadd.f32 0.0, %v567
  %v569 = vpop.f32.mrb[0].mxu0
  %570 = vmatprep.mubr.f32.mxu0 0.0
  %571 = vmatmul.mubr.f32.gmra.mrb[0].mxu0 %v482
  %v572 = vpop.f32.mrb[0].mxu0
  %v573 = vadd.f32 0.0, %v572
  %v574 = vpop.f32.mrb[0].mxu0
  %575 = vmatprep.mubr.f32.mxu0 0.0
  %576 = vmatmul.mubr.f32.gmra.mrb[0].mxu0 %v485
  %v577 = vpop.f32.mrb[0].mxu0
  %v578 = vadd.f32 0.0, %v577
  %v579 = vpop.f32.mrb[0].mxu0
  %580 = vdwg.mxu0
  %vm581 = vcmask 64512
  %v583 = vsel %vm581, %v464, 0
  %v586 = vsel %vm581, %v465, 0
  %v589 = vsel %vm581, %v466, 0
  %v592 = vsel %vm581, %v467, 0
  %v595 = vsel %vm581, %v468, 0
  %597 = vmatprep.subr.mxu0 0.0
  %598 = vmatpush1.msra.mxu0 %v469
  %599 = vmatprep.subr.mxu0 0.0
  %600 = vmatpush1.msra.mxu0 0.0
  %601 = vmatprep.subr.mxu0 0.0
  %602 = vmatpush1.msra.mxu0 0.0
  %603 = vmatprep.subr.mxu0 0.0
  %604 = vmatpush1.msra.mxu0 0.0
  %605 = vmatprep.subr.mxu0 0.0
  %606 = vmatpush1.msra.mxu0 0.0
  %607 = vmatprep.subr.mxu0 0.0
  %608 = vmatpush1.msra.mxu0 0.0
  %609 = vmatprep.subr.mxu0 0.0
  %610 = vmatpush1.msra.mxu0 0.0
  %611 = vmatprep.subr.mxu0 0.0
  %612 = vmatpush1.msra.mxu0 0.0
  %613 = vmatprep.subr.mxu0 0.0
  %614 = vmatpush1.msra.mxu0 0.0
  %615 = vmatprep.subr.mxu0 0.0
  %616 = vmatpush1.msra.mxu0 0.0
  %617 = vmatprep.subr.mxu0 0.0
  %618 = vmatpush1.msra.mxu0 0.0
  %619 = vmatprep.subr.mxu0 0.0
  %620 = vmatpush1.msra.mxu0 0.0
  %621 = vmatprep.subr.mxu0 0.0
  %622 = vmatpush1.msra.mxu0 0.0
  %623 = vmatprep.subr.mxu0 0.0
  %624 = vmatpush1.msra.mxu0 0.0
  %625 = vmatprep.subr.mxu0 0.0
  %626 = vmatpush1.msra.mxu0 0.0
  %627 = vmatprep.subr.mxu0 0.0
  %628 = vmatpush1.msra.mxu0 0.0
  %629 = vmatprep.subr.mxu0 0.0
  %630 = vmatpush1.msra.mxu0 0.0
  %631 = vmatprep.subr.mxu0 0.0
  %632 = vmatpush1.msra.mxu0 0.0
  %633 = vmatprep.subr.mxu0 0.0
  %634 = vmatpush1.msra.mxu0 0.0
  %635 = vmatprep.subr.mxu0 0.0
  %636 = vmatpush1.msra.mxu0 0.0
  %637 = vmatprep.subr.mxu0 0.0
  %638 = vmatpush1.msra.mxu0 0.0
  %639 = vmatprep.subr.mxu0 0.0
  %640 = vmatpush1.msra.mxu0 0.0
  %641 = vmatprep.subr.mxu0 0.0
  %642 = vmatpush1.msra.mxu0 0.0
  %643 = vmatprep.subr.mxu0 0.0
  %644 = vmatpush1.msra.mxu0 0.0
  %645 = vmatprep.subr.mxu0 0.0
  %646 = vmatpush1.msra.mxu0 0.0
  %647 = vmatprep.subr.mxu0 0.0
  %648 = vmatpush1.msra.mxu0 0.0
  %649 = vmatprep.subr.mxu0 0.0
  %650 = vmatpush1.msra.mxu0 0.0
  %651 = vmatprep.subr.mxu0 0.0
  %652 = vmatpush1.msra.mxu0 0.0
  %653 = vmatprep.subr.mxu0 0.0
  %654 = vmatpush1.msra.mxu0 0.0
  %655 = vmatprep.subr.mxu0 0.0
  %656 = vmatpush1.msra.mxu0 0.0
  %657 = vmatprep.subr.mxu0 0.0
  %658 = vmatpush1.msra.mxu0 0.0
  %659 = vmatprep.subr.mxu0 0.0
  %660 = vmatpush1.msra.mxu0 0.0
  %661 = vmatprep.mubr.f32.mxu0 0.0
  %662 = vmatmul.mubr.f32.gmra.mrb[0].mxu0 %v583
  %v663 = vpop.f32.mrb[0].mxu0
  %v664 = vadd.f32 %v558, %v663
  %v665 = vpop.f32.mrb[0].mxu0
  %666 = vmatprep.mubr.f32.mxu0 0.0
  %667 = vmatmul.mubr.f32.gmra.mrb[0].mxu0 %v586
  %v668 = vpop.f32.mrb[0].mxu0
  %v669 = vadd.f32 %v563, %v668
  %v670 = vpop.f32.mrb[0].mxu0
  %671 = vmatprep.mubr.f32.mxu0 0.0
  %672 = vmatmul.mubr.f32.gmra.mrb[0].mxu0 %v589
  %v673 = vpop.f32.mrb[0].mxu0
  %v674 = vadd.f32 %v568, %v673
  %v675 = vpop.f32.mrb[0].mxu0
  %676 = vmatprep.mubr.f32.mxu0 0.0
  %677 = vmatmul.mubr.f32.gmra.mrb[0].mxu0 %v592
  %v678 = vpop.f32.mrb[0].mxu0
  %v679 = vadd.f32 %v573, %v678
  %v680 = vpop.f32.mrb[0].mxu0
  %681 = vmatprep.mubr.f32.mxu0 0.0
  %682 = vmatmul.mubr.f32.gmra.mrb[0].mxu0 %v595
  %v683 = vpop.f32.mrb[0].mxu0
  %v684 = vadd.f32 %v578, %v683
  %v685 = vpop.f32.mrb[0].mxu0
  %686 = vdwg.mxu0
  %v687 = vld [vmem:[%s11] sm:$0x1]
  %v689 = vlaneseq
  %v690 = vshrl.u32 %v689, 7
  %v691 = vsub.s32 0, %v690
  %v692 = vrot.slane %v687, %v691
  %v694 = vadd.f32 %v664, %v692
  %v695 = vadd.f32 %v669, %v692
  %v696 = vadd.f32 %v674, %v692
  %v697 = vadd.f32 %v679, %v692
  %v698 = vadd.f32 %v684, %v692
  %v699 = vmax.f32 %v694, 0.0
  %v700 = vmax.f32 %v695, 0.0
  %v701 = vmax.f32 %v696, 0.0
  %v702 = vmax.f32 %v697, 0.0
  %v703 = vmax.f32 %v698, 0.0
  %v704 = vld [vmem:[%s12] sm:$0xff]
  %v705 = vld [vmem:[%s12 + $0x8] sm:$0xff]
  %v706 = vld [vmem:[%s13] sm:$0x1]
  %v708 = vlaneseq
  %v709 = vshrl.u32 %v708, 7
  %v710 = vsub.s32 0, %v709
  %v711 = vrot.slane %v706, %v710
  %v714 = vsel %vm77, %v699, 0
  %v717 = vsel %vm77, %v700, 0
  %v720 = vsel %vm77, %v701, 0
  %v723 = vsel %vm77, %v702, 0
  %v726 = vsel %vm77, %v703, 0
  %728 = vmatprep.subr.mxu0 0.0
  %729 = vmatpush1.msra.mxu0 %v704
  %730 = vmatprep.subr.mxu0 0.0
  %731 = vmatpush1.msra.mxu0 %v705
  %732 = vmatprep.subr.mxu0 0.0
  %733 = vmatpush1.msra.mxu0 0.0
  %734 = vmatprep.subr.mxu0 0.0
  %735 = vmatpush1.msra.mxu0 0.0
  %736 = vmatprep.subr.mxu0 0.0
  %737 = vmatpush1.msra.mxu0 0.0
  %738 = vmatprep.subr.mxu0 0.0
  %739 = vmatpush1.msra.mxu0 0.0
  %740 = vmatprep.subr.mxu0 0.0
  %741 = vmatpush1.msra.mxu0 0.0
  %742 = vmatprep.subr.mxu0 0.0
  %743 = vmatpush1.msra.mxu0 0.0
  %744 = vmatprep.subr.mxu0 0.0
  %745 = vmatpush1.msra.mxu0 0.0
  %746 = vmatprep.subr.mxu0 0.0
  %747 = vmatpush1.msra.mxu0 0.0
  %748 = vmatprep.subr.mxu0 0.0
  %749 = vmatpush1.msra.mxu0 0.0
  %750 = vmatprep.subr.mxu0 0.0
  %751 = vmatpush1.msra.mxu0 0.0
  %752 = vmatprep.subr.mxu0 0.0
  %753 = vmatpush1.msra.mxu0 0.0
  %754 = vmatprep.subr.mxu0 0.0
  %755 = vmatpush1.msra.mxu0 0.0
  %756 = vmatprep.subr.mxu0 0.0
  %757 = vmatpush1.msra.mxu0 0.0
  %758 = vmatprep.subr.mxu0 0.0
  %759 = vmatpush1.msra.mxu0 0.0
  %760 = vmatprep.subr.mxu0 0.0
  %761 = vmatpush1.msra.mxu0 0.0
  %762 = vmatprep.subr.mxu0 0.0
  %763 = vmatpush1.msra.mxu0 0.0
  %764 = vmatprep.subr.mxu0 0.0
  %765 = vmatpush1.msra.mxu0 0.0
  %766 = vmatprep.subr.mxu0 0.0
  %767 = vmatpush1.msra.mxu0 0.0
  %768 = vmatprep.subr.mxu0 0.0
  %769 = vmatpush1.msra.mxu0 0.0
  %770 = vmatprep.subr.mxu0 0.0
  %771 = vmatpush1.msra.mxu0 0.0
  %772 = vmatprep.subr.mxu0 0.0
  %773 = vmatpush1.msra.mxu0 0.0
  %774 = vmatprep.subr.mxu0 0.0
  %775 = vmatpush1.msra.mxu0 0.0
  %776 = vmatprep.subr.mxu0 0.0
  %777 = vmatpush1.msra.mxu0 0.0
  %778 = vmatprep.subr.mxu0 0.0
  %779 = vmatpush1.msra.mxu0 0.0
  %780 = vmatprep.subr.mxu0 0.0
  %781 = vmatpush1.msra.mxu0 0.0
  %782 = vmatprep.subr.mxu0 0.0
  %783 = vmatpush1.msra.mxu0 0.0
  %784 = vmatprep.subr.mxu0 0.0
  %785 = vmatpush1.msra.mxu0 0.0
  %786 = vmatprep.subr.mxu0 0.0
  %787 = vmatpush1.msra.mxu0 0.0
  %788 = vmatprep.subr.mxu0 0.0
  %789 = vmatpush1.msra.mxu0 0.0
  %790 = vmatprep.subr.mxu0 0.0
  %791 = vmatpush1.msra.mxu0 0.0
  %792 = vmatprep.mubr.f32.mxu0 0.0
  %793 = vmatmul.mubr.f32.gmra.mrb[0].mxu0 %v714
  %v794 = vpop.f32.mrb[0].mxu0
  %v795 = vadd.f32 %v711, %v794
  %v796 = vpop.f32.mrb[0].mxu0
  %797 = vmatprep.mubr.f32.mxu0 0.0
  %798 = vmatmul.mubr.f32.gmra.mrb[0].mxu0 %v717
  %v799 = vpop.f32.mrb[0].mxu0
  %v800 = vadd.f32 %v711, %v799
  %v801 = vpop.f32.mrb[0].mxu0
  %802 = vmatprep.mubr.f32.mxu0 0.0
  %803 = vmatmul.mubr.f32.gmra.mrb[0].mxu0 %v720
  %v804 = vpop.f32.mrb[0].mxu0
  %v805 = vadd.f32 %v711, %v804
  %v806 = vpop.f32.mrb[0].mxu0
  %807 = vmatprep.mubr.f32.mxu0 0.0
  %808 = vmatmul.mubr.f32.gmra.mrb[0].mxu0 %v723
  %v809 = vpop.f32.mrb[0].mxu0
  %v810 = vadd.f32 %v711, %v809
  %v811 = vpop.f32.mrb[0].mxu0
  %812 = vmatprep.mubr.f32.mxu0 0.0
  %813 = vmatmul.mubr.f32.gmra.mrb[0].mxu0 %v726
  %v814 = vpop.f32.mrb[0].mxu0
  %v815 = vadd.f32 %v711, %v814
  %v816 = vpop.f32.mrb[0].mxu0
  %817 = vdwg.mxu0
  %v818 = vmax.f32 %v795, 0.0
  %v819 = vmax.f32 %v800, 0.0
  %v820 = vmax.f32 %v805, 0.0
  %v821 = vmax.f32 %v810, 0.0
  %v822 = vmax.f32 %v815, 0.0
  %v823 = vld [vmem:[%s14] sm:$0xff]
  %v824 = vld [vmem:[%s14 + $0x8] sm:$0xff]
  %v825 = vld [vmem:[%s14 + $0x10] sm:$0xff]
  %v826 = vld [vmem:[%s14 + $0x18] sm:$0xff]
  %v827 = vld [vmem:[%s15] sm:$0x1]
  %v829 = vlaneseq
  %v830 = vshrl.u32 %v829, 7
  %v831 = vsub.s32 0, %v830
  %v832 = vrot.slane %v827, %v831
  %v835 = vsel %vm199, %v818, 0
  %v838 = vsel %vm199, %v819, 0
  %v841 = vsel %vm199, %v820, 0
  %v844 = vsel %vm199, %v821, 0
  %v847 = vsel %vm199, %v822, 0
  %849 = vmatprep.subr.mxu0 0.0
  %850 = vmatpush1.msra.mxu0 %v823
  %851 = vmatprep.subr.mxu0 0.0
  %852 = vmatpush1.msra.mxu0 %v824
  %853 = vmatprep.subr.mxu0 0.0
  %854 = vmatpush1.msra.mxu0 %v825
  %855 = vmatprep.subr.mxu0 0.0
  %856 = vmatpush1.msra.mxu0 %v826
  %857 = vmatprep.subr.mxu0 0.0
  %858 = vmatpush1.msra.mxu0 0.0
  %859 = vmatprep.subr.mxu0 0.0
  %860 = vmatpush1.msra.mxu0 0.0
  %861 = vmatprep.subr.mxu0 0.0
  %862 = vmatpush1.msra.mxu0 0.0
  %863 = vmatprep.subr.mxu0 0.0
  %864 = vmatpush1.msra.mxu0 0.0
  %865 = vmatprep.subr.mxu0 0.0
  %866 = vmatpush1.msra.mxu0 0.0
  %867 = vmatprep.subr.mxu0 0.0
  %868 = vmatpush1.msra.mxu0 0.0
  %869 = vmatprep.subr.mxu0 0.0
  %870 = vmatpush1.msra.mxu0 0.0
  %871 = vmatprep.subr.mxu0 0.0
  %872 = vmatpush1.msra.mxu0 0.0
  %873 = vmatprep.subr.mxu0 0.0
  %874 = vmatpush1.msra.mxu0 0.0
  %875 = vmatprep.subr.mxu0 0.0
  %876 = vmatpush1.msra.mxu0 0.0
  %877 = vmatprep.subr.mxu0 0.0
  %878 = vmatpush1.msra.mxu0 0.0
  %879 = vmatprep.subr.mxu0 0.0
  %880 = vmatpush1.msra.mxu0 0.0
  %881 = vmatprep.subr.mxu0 0.0
  %882 = vmatpush1.msra.mxu0 0.0
  %883 = vmatprep.subr.mxu0 0.0
  %884 = vmatpush1.msra.mxu0 0.0
  %885 = vmatprep.subr.mxu0 0.0
  %886 = vmatpush1.msra.mxu0 0.0
  %887 = vmatprep.subr.mxu0 0.0
  %888 = vmatpush1.msra.mxu0 0.0
  %889 = vmatprep.subr.mxu0 0.0
  %890 = vmatpush1.msra.mxu0 0.0
  %891 = vmatprep.subr.mxu0 0.0
  %892 = vmatpush1.msra.mxu0 0.0
  %893 = vmatprep.subr.mxu0 0.0
  %894 = vmatpush1.msra.mxu0 0.0
  %895 = vmatprep.subr.mxu0 0.0
  %896 = vmatpush1.msra.mxu0 0.0
  %897 = vmatprep.subr.mxu0 0.0
  %898 = vmatpush1.msra.mxu0 0.0
  %899 = vmatprep.subr.mxu0 0.0
  %900 = vmatpush1.msra.mxu0 0.0
  %901 = vmatprep.subr.mxu0 0.0
  %902 = vmatpush1.msra.mxu0 0.0
  %903 = vmatprep.subr.mxu0 0.0
  %904 = vmatpush1.msra.mxu0 0.0
  %905 = vmatprep.subr.mxu0 0.0
  %906 = vmatpush1.msra.mxu0 0.0
  %907 = vmatprep.subr.mxu0 0.0
  %908 = vmatpush1.msra.mxu0 0.0
  %909 = vmatprep.subr.mxu0 0.0
  %910 = vmatpush1.msra.mxu0 0.0
  %911 = vmatprep.subr.mxu0 0.0
  %912 = vmatpush1.msra.mxu0 0.0
  %913 = vmatprep.mubr.f32.mxu0 0.0
  %914 = vmatmul.mubr.f32.gmra.mrb[0].mxu0 %v835
  %v915 = vpop.f32.mrb[0].mxu0
  %v916 = vadd.f32 %v832, %v915
  %v917 = vpop.f32.mrb[0].mxu0
  %918 = vmatprep.mubr.f32.mxu0 0.0
  %919 = vmatmul.mubr.f32.gmra.mrb[0].mxu0 %v838
  %v920 = vpop.f32.mrb[0].mxu0
  %v921 = vadd.f32 %v832, %v920
  %v922 = vpop.f32.mrb[0].mxu0
  %923 = vmatprep.mubr.f32.mxu0 0.0
  %924 = vmatmul.mubr.f32.gmra.mrb[0].mxu0 %v841
  %v925 = vpop.f32.mrb[0].mxu0
  %v926 = vadd.f32 %v832, %v925
  %v927 = vpop.f32.mrb[0].mxu0
  %928 = vmatprep.mubr.f32.mxu0 0.0
  %929 = vmatmul.mubr.f32.gmra.mrb[0].mxu0 %v844
  %v930 = vpop.f32.mrb[0].mxu0
  %v931 = vadd.f32 %v832, %v930
  %v932 = vpop.f32.mrb[0].mxu0
  %933 = vmatprep.mubr.f32.mxu0 0.0
  %934 = vmatmul.mubr.f32.gmra.mrb[0].mxu0 %v847
  %v935 = vpop.f32.mrb[0].mxu0
  %v936 = vadd.f32 %v832, %v935
  %v937 = vpop.f32.mrb[0].mxu0
  %938 = vdwg.mxu0
  %939 = vst.msk [vmem:[%s16] sm:$0xff] %vm77, %v916
  %940 = vst.msk [vmem:[%s16 + $0x8] sm:$0xff] %vm77, %v921
  %941 = vst.msk [vmem:[%s16 + $0x10] sm:$0xff] %vm77, %v926
  %942 = vst.msk [vmem:[%s16 + $0x18] sm:$0xff] %vm77, %v931
  %943 = vst.msk [vmem:[%s16 + $0x20] sm:$0xff] %vm77, %v936
  %949 = vrot.lane.b32.xlu0 %v401, 16
  %v950 = vpop.permute.xlu0 %949
  %951 = vrot.lane.b32.xlu0 %v406, 16
  %v952 = vpop.permute.xlu0 %951
  %953 = vrot.lane.b32.xlu0 %v411, 16
  %v954 = vpop.permute.xlu0 %953
  %955 = vrot.lane.b32.xlu0 %v416, 16
  %v956 = vpop.permute.xlu0 %955
  %957 = vrot.lane.b32.xlu0 %v421, 16
  %v958 = vpop.permute.xlu0 %957
  %vm964 = vcmask 261248
  %965 = vst.msk [vmem:[%s16] sm:$0xff] %vm964, %v950
  %966 = vst.msk [vmem:[%s16 + $0x8] sm:$0xff] %vm964, %v952
  %967 = vst.msk [vmem:[%s16 + $0x10] sm:$0xff] %vm964, %v954
  %968 = vst.msk [vmem:[%s16 + $0x18] sm:$0xff] %vm964, %v956
  %969 = vst.msk [vmem:[%s16 + $0x20] sm:$0xff] %vm964, %v958
  // Predicated region
  $region66: #{cvae_forward.1} parent=0 // pred_check
    _
  $region67: #{cvae_forward.1} parent=0 // pred_check_branch
    %971 = sbr.rel (0) target = $region69
  $region68: #{cvae_forward.1} parent=0 // pred_region
    _
  $region69: #{cvae_forward.1} parent=0 // pred_fallthru
    _
  // Predicated region
  $region70: #{cvae_forward.1} parent=0 // pred_check
    _
  $region71: #{cvae_forward.1} parent=0 // pred_check_branch
    %973 = sbr.rel (0) target = $region73
  $region72: #{cvae_forward.1} parent=0 // pred_region
    _
  $region73: #{cvae_forward.1} parent=0 // pred_fallthru
    _

</llo_original>
